<compile_context>
chip_gen: v7x
topology: tpu7x:2x2x1
jax: 0.10.0
libtpu: 0.0.40
codegen_flags: <defaults>
</compile_context>

<pallas_src>
import functools

import jax
import jax.numpy as jnp
import numpy as np
from jax.experimental import pallas as pl
from jax.experimental.pallas import tpu as pltpu

LANE = 128


def _round_up(v, m):
    return (v + m - 1) // m * m


def _vmem_capacity_bytes():
    """Physical VMEM per core; conservative 64 MiB (v7x) fallback."""
    try:
        info = pltpu.get_tpu_info()
        cap = getattr(info, "vmem_capacity_bytes", None)
        if cap:
            return int(cap)
    except Exception:
        pass
    return 64 << 20


def _vmem_limit(est_bytes, cap):
    limit = int(est_bytes * 1.4) + (4 << 20)
    limit = max(limit, 32 << 20)
    return int(min(limit, cap - (2 << 20)))   # never exceed physical VMEM


# ----------------------------------------------------------------------------
# Kernels
# ----------------------------------------------------------------------------
def mlp_kernel(x_ref, w1_ref, b1_ref, w2_ref, b2_ref, z0_ref):
    """z0 = lin2(relu(lin1(x))) for one row tile."""
    h = jnp.dot(x_ref[...], w1_ref[...], preferred_element_type=jnp.float32)
    h = jnp.maximum(h + b1_ref[...], 0.0)
    z0 = jnp.dot(h, w2_ref[...], preferred_element_type=jnp.float32) + b2_ref[...]
    z0_ref[...] = z0.astype(z0_ref.dtype)


def prop_resident_kernel(temp_ref, s_ref, z0_ref, out_ref, z_ref):
    """One GPR hop per grid step. S / z0 / out have constant block indices, so
    they are fetched once and stay resident in VMEM across all K hops; out_ref
    doubles as the f32 hidden accumulator and is written back to HBM once."""
    k = pl.program_id(0)

    @pl.when(k == 0)
    def _init():
        z0 = z0_ref[...]
        out_ref[...] = temp_ref[0] * z0              # hidden = temp[0] * z0
        z_ref[...] = z0.astype(z_ref.dtype)          # z carrier (bf16)

    z_new = jnp.dot(s_ref[...], z_ref[...], preferred_element_type=jnp.float32)
    out_ref[...] = out_ref[...] + temp_ref[k + 1] * z_new
    z_ref[...] = z_new.astype(z_ref.dtype)


def prop_tiled_kernel(temp_ref, s_ref, z0_ref, out_ref,
                      z_ref, hid_ref, acc_ref, *, tm, tk):
    """Streamed-S path: grid (K, row tiles, contraction tiles)."""
    k = pl.program_id(0)        # GPR hop (loop-carried)
    i = pl.program_id(1)        # output row tile of S
    j = pl.program_id(2)        # contraction (column) tile of S
    nj = pl.num_programs(2)

    @pl.when((k == 0) & (i == 0) & (j == 0))
    def _init():
        z0 = z0_ref[...]
        hid_ref[...] = temp_ref[0] * z0
        z_ref[0] = z0.astype(z_ref.dtype)            # hop-0 source slot

    src = k % 2
    dst = 1 - src
    row_i = pl.multiple_of(i * tm, tm)
    row_j = pl.multiple_of(j * tk, tk)

    z_chunk = z_ref[src, pl.ds(row_j, tk), :]        # bf16, no per-step cast
    part = jnp.dot(s_ref[...], z_chunk, preferred_element_type=jnp.float32)

    @pl.when(j == 0)
    def _first():
        acc_ref[...] = part

    @pl.when(j > 0)
    def _accum():
        acc_ref[...] = acc_ref[...] + part

    @pl.when(j == nj - 1)
    def _finish():
        acc = acc_ref[...]
        z_ref[dst, pl.ds(row_i, tm), :] = acc.astype(z_ref.dtype)
        hid_rows = hid_ref[pl.ds(row_i, tm), :] + temp_ref[k + 1] * acc
        hid_ref[pl.ds(row_i, tm), :] = hid_rows
        # Lane-dense [tm, Cpad] store. NOTE: this slab is flushed once per hop
        # (low-priority redundant writeback, small vs. S traffic -- accepted).
        out_ref[...] = hid_rows.astype(out_ref.dtype)


# ----------------------------------------------------------------------------
# Graph normalization (dense equivalent of gcn_norm(..., 'sym'))
# ----------------------------------------------------------------------------
def gcn_norm_dense(edge_index, num_nodes, dtype=jnp.float32):
    """S[c, r] = d[c] * A[r, c] * d[r] so x_new = S @ x matches PyG scatter-add
    aggregation at the target node. Self-loop handling follows
    add_remaining_self_loops (existing kept, missing filled with 1.0)."""
    row, col = edge_index[0], edge_index[1]
    w = jnp.ones(row.shape, dtype=jnp.float32)
    off_diag = row != col

    A = jnp.zeros((num_nodes, num_nodes), jnp.float32)
    A = A.at[row, col].add(jnp.where(off_diag, w, 0.0))
    diag = jnp.ones((num_nodes,), jnp.float32)
    safe_idx = jnp.where(off_diag, num_nodes, row)            # OOB -> dropped
    diag = diag.at[safe_idx].set(jnp.where(off_diag, 1.0, w), mode="drop")
    A = A + jnp.diag(diag)

    deg = A.sum(axis=0)                                       # scatter_add over col
    d = jnp.where(deg > 0, 1.0 / jnp.sqrt(jnp.maximum(deg, 1e-12)), 0.0)
    S = (d[:, None] * A.T) * d[None, :]
    return S.astype(dtype)


def _choose_tiles(Np, Cpad, budget):
    """Largest (tm, tk) tiles that fit the VMEM budget; prefer a large tk."""
    tm_opts = [t for t in (1024, 512, 256, 128) if t <= Np and Np % t == 0] or [Np]
    tk_opts = [t for t in (2048, 1024, 512, 256, 128) if t <= Np and Np % t == 0] or [Np]
    persistent = 2 * Np * Cpad * 2 + Np * Cpad * 4 + 2 * Np * Cpad * 4
    for tk in tk_opts:
        for tm in tm_opts:
            need = persistent + 2 * tm * tk * 2 + tm * Cpad * 4 + 2 * tm * Cpad * 4
            if need + (6 << 20) <= budget:
                return tm, tk
    return tm_opts[-1], tk_opts[-1]


# ----------------------------------------------------------------------------
# Forward wrapper
# ----------------------------------------------------------------------------
def gprgnn_forward(x, edge_index, w1, b1, w2, b2, temp, K, *,
                   force_tiled=False, tile_m=None, tile_k=None):
    N, F = x.shape
    Hd = w1.shape[1]
    C = w2.shape[1]
    assert K >= 1

    cap = _vmem_capacity_bytes()
    Cpad = max(LANE, _round_up(C, LANE))        # lane-dense class dim
    Np = max(LANE, _round_up(N, LANE))

    # Dense normalized propagation matrix in bf16 (dominant operand); padded
    # rows/cols are exactly zero. All matmuls accumulate in f32.
    S = gcn_norm_dense(edge_index, N, jnp.float32)
    S = jnp.pad(S, ((0, Np - N), (0, Np - N))).astype(jnp.bfloat16)

    # ---------------- MLP kernel: z0 = lin2(relu(lin1(x))) ------------------
    xp = jnp.pad(x.astype(jnp.float32), ((0, Np - N), (0, 0)))
    w1f = w1.astype(jnp.float32)
    b1r = b1.astype(jnp.float32).reshape(1, Hd)
    w2p = jnp.pad(w2.astype(jnp.float32), ((0, 0), (0, Cpad - C)))
    b2p = jnp.pad(b2.astype(jnp.float32), (0, Cpad - C)).reshape(1, Cpad)
    temp = temp.astype(jnp.float32)

    tr = next(t for t in (512, 256, 128) if t <= Np and Np % t == 0)
    mlp_est = 2 * (tr * F + F * Hd + Hd + Hd * Cpad + Cpad + tr * Cpad) * 4
    z0 = pl.pallas_call(
        mlp_kernel,
        out_shape=jax.ShapeDtypeStruct((Np, Cpad), jnp.float32),
        grid=(Np // tr,),
        in_specs=[
            pl.BlockSpec((tr, F), lambda r: (r, 0)),
            pl.BlockSpec((F, Hd), lambda r: (0, 0)),
            pl.BlockSpec((1, Hd), lambda r: (0, 0)),
            pl.BlockSpec((Hd, Cpad), lambda r: (0, 0)),
            pl.BlockSpec((1, Cpad), lambda r: (0, 0)),
        ],
        out_specs=pl.BlockSpec((tr, Cpad), lambda r: (r, 0)),
        compiler_params=pltpu.CompilerParams(
            dimension_semantics=("parallel",),
            vmem_limit_bytes=_vmem_limit(mlp_est, cap)),
    )(xp, w1f, b1r, w2p, b2p)

    # Zero padded rows of z0 (ReLU(b1)@w2 + b2 is non-zero on padded rows);
    # keeps correctness independent of how S's padding is defined.
    if Np > N:
        z0 = jnp.where((jnp.arange(Np) < N)[:, None], z0, 0.0)

    # ---------------- GPR propagation kernel --------------------------------
    resident_need = (2 * Np * Np * 2          # S (bf16, double-buffered)
                     + 2 * Np * Cpad * 4      # z0 input
                     + 2 * Np * Cpad * 4      # out / hidden accumulator
                     + Np * Cpad * 2)         # z carrier scratch (bf16)
    use_resident = (not force_tiled) and (resident_need + (6 << 20) <= int(cap * 0.85))

    if use_resident:
        # S is fetched from HBM exactly once and reused for all K hops.
        out = pl.pallas_call(
            prop_resident_kernel,
            out_shape=jax.ShapeDtypeStruct((Np, Cpad), jnp.float32),
            grid_spec=pltpu.PrefetchScalarGridSpec(
                num_scalar_prefetch=1,                           # temp -> SMEM
                grid=(K,),
                in_specs=[
                    pl.BlockSpec((Np, Np), lambda k, t: (0, 0)),     # S resident
                    pl.BlockSpec((Np, Cpad), lambda k, t: (0, 0)),   # z0 resident
                ],
                out_specs=pl.BlockSpec((Np, Cpad), lambda k, t: (0, 0)),
                scratch_shapes=[pltpu.VMEM((Np, Cpad), jnp.bfloat16)],
            ),
            compiler_params=pltpu.CompilerParams(
                dimension_semantics=("arbitrary",),
                vmem_limit_bytes=_vmem_limit(resident_need, cap)),
        )(temp, S, z0)
    else:
        budget = int(cap * 0.85)
        if tile_m is not None and tile_k is not None:
            tm, tk = tile_m, tile_k
        else:
            tm, tk = _choose_tiles(Np, Cpad, budget)
        assert Np % tm == 0 and Np % tk == 0
        tiled_need = (2 * tm * tk * 2 + 2 * Np * Cpad * 4 + 2 * tm * Cpad * 4
                      + 2 * Np * Cpad * 2 + Np * Cpad * 4 + tm * Cpad * 4)
        out = pl.pallas_call(
            functools.partial(prop_tiled_kernel, tm=tm, tk=tk),
            out_shape=jax.ShapeDtypeStruct((Np, Cpad), jnp.float32),
            grid_spec=pltpu.PrefetchScalarGridSpec(
                num_scalar_prefetch=1,
                grid=(K, Np // tm, Np // tk),
                in_specs=[
                    pl.BlockSpec((tm, tk), lambda k, i, j, t: (i, j)),    # S tiles
                    pl.BlockSpec((Np, Cpad), lambda k, i, j, t: (0, 0)),  # z0 resident
                ],
                out_specs=pl.BlockSpec((tm, Cpad), lambda k, i, j, t: (i, 0)),
                scratch_shapes=[
                    pltpu.VMEM((2, Np, Cpad), jnp.bfloat16),   # z ping-pong (bf16)
                    pltpu.VMEM((Np, Cpad), jnp.float32),       # hidden (f32)
                    pltpu.VMEM((tm, Cpad), jnp.float32),       # j-sweep accumulator
                ],
            ),
            compiler_params=pltpu.CompilerParams(
                dimension_semantics=("arbitrary", "arbitrary", "arbitrary"),
                vmem_limit_bytes=_vmem_limit(tiled_need, cap)),
        )(temp, S, z0)

    return out[:N, :C].astype(x.dtype)


# ----------------------------------------------------------------------------
# Pure-JAX reference
# ----------------------------------------------------------------------------
def _reference(x, S, w1, b1, w2, b2, temp, K):
    h = jnp.maximum(x @ w1 + b1, 0.0)
    z = h @ w2 + b2
    hidden = temp[0] * z
    for kk in range(K):
        z = S @ z
        hidden = hidden + temp[kk + 1] * z
    return hidden


if __name__ == "__main__":
    def make_ring(N):
        src = np.arange(N)
        dst = (src + 1) % N
        return jnp.asarray(np.stack([np.concatenate([src, dst]),
                                     np.concatenate([dst, src])]), dtype=jnp.int32)

    # Config consistent with GPRGNN.__init__:
    #   num_features = 32, hidden = 32, num_classes = 8, K = 4, alpha = 0.1,
    #   Init = 'PPR', norm = 'sym', eval mode (dropout identity).
    F, H, C, K, alpha = 32, 32, 8, 4, 0.1

    key = jax.random.PRNGKey(0)
    k1, kb1, k2, kb2, kx1, kx2 = jax.random.split(key, 6)

    w1 = jax.random.uniform(k1, (F, H), jnp.float32, -1.0, 1.0) / np.sqrt(F)
    b1 = jax.random.uniform(kb1, (H,), jnp.float32, -1.0, 1.0) / np.sqrt(F)
    w2 = jax.random.uniform(k2, (H, C), jnp.float32, -1.0, 1.0) / np.sqrt(H)
    b2 = jax.random.uniform(kb2, (C,), jnp.float32, -1.0, 1.0) / np.sqrt(H)

    # GPR_prop 'PPR' gamma init: temp[k] = alpha*(1-alpha)^k, temp[K] = (1-alpha)^K
    temp_np = alpha * (1 - alpha) ** np.arange(K + 1)
    temp_np[-1] = (1 - alpha) ** K
    temp = jnp.asarray(temp_np, dtype=jnp.float32)

    # --- test 1: small graph -> resident-S path -----------------------------
    N1 = 64
    x1 = jax.random.normal(kx1, (N1, F), dtype=jnp.float32)
    ei1 = make_ring(N1)
    out1 = gprgnn_forward(x1, ei1, w1, b1, w2, b2, temp, K)
    jax.block_until_ready(out1)
    assert out1.shape == (N1, C)
    ref1 = _reference(x1, gcn_norm_dense(ei1, N1), w1, b1, w2, b2, temp, K)
    np.testing.assert_allclose(np.asarray(out1), np.asarray(ref1), rtol=5e-2, atol=5e-2)

    # --- test 2: larger graph, forced multi-tile streaming path -------------
    N2 = 320
    x2 = jax.random.normal(kx2, (N2, F), dtype=jnp.float32)
    ei2 = make_ring(N2)
    out2 = gprgnn_forward(x2, ei2, w1, b1, w2, b2, temp, K,
                          force_tiled=True, tile_m=128, tile_k=128)
    jax.block_until_ready(out2)
    assert out2.shape == (N2, C)
    ref2 = _reference(x2, gcn_norm_dense(ei2, N2), w1, b1, w2, b2, temp, K)
    np.testing.assert_allclose(np.asarray(out2), np.asarray(ref2), rtol=5e-2, atol=5e-2)

    print("KERNEL_OK")
</pallas_src>

<mosaic_0001>
module attributes {stable_mosaic.version = 11 : i64} {
  func.func @mlp_kernel(%arg0: i32, %arg1: memref<128x32xf32, #tpu.memory_space<vmem>>, %arg2: memref<32x32xf32, #tpu.memory_space<vmem>>, %arg3: memref<1x32xf32, #tpu.memory_space<vmem>>, %arg4: memref<32x128xf32, #tpu.memory_space<vmem>>, %arg5: memref<1x128xf32, #tpu.memory_space<vmem>>, %arg6: memref<128x128xf32, #tpu.memory_space<vmem>>) attributes {dimension_semantics = [#tpu.dimension_semantics<parallel>], iteration_bounds = array<i64: 1>, scalar_prefetch = 0 : i64, scratch_operands = 0 : i64, tpu.core_type = #tpu.core_type<tc>, window_params = [{transform_indices = @transform_0, window_bounds = array<i64: 128, 32>}, {pipeline_mode = #tpu.pipeline_mode<synchronous>, transform_indices = @transform_1, window_bounds = array<i64: 32, 32>}, {pipeline_mode = #tpu.pipeline_mode<synchronous>, transform_indices = @transform_2, window_bounds = array<i64: 1, 32>}, {pipeline_mode = #tpu.pipeline_mode<synchronous>, transform_indices = @transform_3, window_bounds = array<i64: 32, 128>}, {pipeline_mode = #tpu.pipeline_mode<synchronous>, transform_indices = @transform_4, window_bounds = array<i64: 1, 128>}, {transform_indices = @transform_5, window_bounds = array<i64: 128, 128>}]} {
    %c0 = arith.constant 0 : index
    %c0_0 = arith.constant 0 : index
    %0 = vector.load %arg1[%c0, %c0_0] : memref<128x32xf32, #tpu.memory_space<vmem>>, vector<128x32xf32>
    %c0_1 = arith.constant 0 : index
    %c0_2 = arith.constant 0 : index
    %1 = vector.load %arg2[%c0_1, %c0_2] : memref<32x32xf32, #tpu.memory_space<vmem>>, vector<32x32xf32>
    %cst = arith.constant dense<0.000000e+00> : vector<128x32xf32>
    %2 = tpu.matmul %0, %1, %cst {dimension_numbers = #tpu.dot_dimension_numbers<[1], [0], [0], [1], [0, 0, 1, 1], [], []>} : vector<128x32xf32>, vector<32x32xf32>, vector<128x32xf32> -> vector<128x32xf32>
    %c0_3 = arith.constant 0 : index
    %c0_4 = arith.constant 0 : index
    %3 = vector.load %arg3[%c0_3, %c0_4] : memref<1x32xf32, #tpu.memory_space<vmem>>, vector<1x32xf32>
    %4 = vector.broadcast %3 : vector<1x32xf32> to vector<128x32xf32>
    %5 = arith.addf %2, %4 : vector<128x32xf32>
    %cst_5 = arith.constant 0.000000e+00 : f32
    %6 = vector.broadcast %cst_5 : f32 to vector<128x32xf32>
    %7 = arith.maximumf %5, %6 : vector<128x32xf32>
    %c0_6 = arith.constant 0 : index
    %c0_7 = arith.constant 0 : index
    %8 = vector.load %arg4[%c0_6, %c0_7] : memref<32x128xf32, #tpu.memory_space<vmem>>, vector<32x128xf32>
    %cst_8 = arith.constant dense<0.000000e+00> : vector<128x128xf32>
    %9 = tpu.matmul %7, %8, %cst_8 {dimension_numbers = #tpu.dot_dimension_numbers<[1], [0], [0], [1], [0, 0, 1, 1], [], []>} : vector<128x32xf32>, vector<32x128xf32>, vector<128x128xf32> -> vector<128x128xf32>
    %c0_9 = arith.constant 0 : index
    %c0_10 = arith.constant 0 : index
    %10 = vector.load %arg5[%c0_9, %c0_10] : memref<1x128xf32, #tpu.memory_space<vmem>>, vector<1x128xf32>
    %11 = vector.broadcast %10 : vector<1x128xf32> to vector<128x128xf32>
    %12 = arith.addf %9, %11 : vector<128x128xf32>
    %c0_11 = arith.constant 0 : index
    %c0_12 = arith.constant 0 : index
    %13 = vector.load %arg6[%c0_11, %c0_12] : memref<128x128xf32, #tpu.memory_space<vmem>>, vector<128x128xf32>
    tpu.vector_store %arg6[%c0_11, %c0_12], %12 {strides = array<i32>} : memref<128x128xf32, #tpu.memory_space<vmem>>, vector<128x128xf32>,
    return
  }
  func.func @transform_0(%arg0: i32) -> (i32, i32) {
    %c0_i32 = arith.constant 0 : i32
    %c0_i32_0 = arith.constant 0 : i32
    return %arg0, %c0_i32 : i32, i32
  }
  func.func @transform_1(%arg0: i32) -> (i32, i32) {
    %c0_i32 = arith.constant 0 : i32
    %c0_i32_0 = arith.constant 0 : i32
    %c0_i32_1 = arith.constant 0 : i32
    return %c0_i32, %c0_i32_0 : i32, i32
  }
  func.func @transform_2(%arg0: i32) -> (i32, i32) {
    %c0_i32 = arith.constant 0 : i32
    %c0_i32_0 = arith.constant 0 : i32
    %c0_i32_1 = arith.constant 0 : i32
    return %c0_i32, %c0_i32_0 : i32, i32
  }
  func.func @transform_3(%arg0: i32) -> (i32, i32) {
    %c0_i32 = arith.constant 0 : i32
    %c0_i32_0 = arith.constant 0 : i32
    %c0_i32_1 = arith.constant 0 : i32
    return %c0_i32, %c0_i32_0 : i32, i32
  }
  func.func @transform_4(%arg0: i32) -> (i32, i32) {
    %c0_i32 = arith.constant 0 : i32
    %c0_i32_0 = arith.constant 0 : i32
    %c0_i32_1 = arith.constant 0 : i32
    return %c0_i32, %c0_i32_0 : i32, i32
  }
  func.func @transform_5(%arg0: i32) -> (i32, i32) {
    %c0_i32 = arith.constant 0 : i32
    %c0_i32_0 = arith.constant 0 : i32
    return %arg0, %c0_i32 : i32, i32
  }
}

</mosaic_0001>

<llo_original>
// kernel: tpu_custom_call.1
$region0: #{tpu_custom_call.1}
  #allocation0 [shape = 'u32[]', space=smem, size = 0x4, offset = 0x4, fixed_abs, tag = 'smem constant byte address 0x4 - core index']
  #allocation1 [shape = 'u32[144,128]{1,0:T(1,128)}', space=vmem, size = 0x12000, scoped, tag = 'internal scratch']
  %s0 = inlined_call_operand.vmem [shape: f32[128,32], index: 0, kind: input, shape index: {}]
  %s1 = inlined_call_operand.vmem [shape: f32[32,32], index: 1, kind: input, shape index: {}]
  %s2 = inlined_call_operand.vmem [shape: f32[1,32], index: 2, kind: input, shape index: {}]
  %s3 = inlined_call_operand.vmem [shape: f32[32,128], index: 3, kind: input, shape index: {}]
  %s4 = inlined_call_operand.vmem [shape: f32[1,128], index: 4, kind: input, shape index: {}]
  %s5 = inlined_call_operand.hbm [shape: f32[128,128], index: 5, kind: output, shape index: {}]
  %s6 = sld [smem:[#allocation0]]
  $region30: #{tpu_custom_call.1} parent=0
    _
  %s8 = ssub.s32 1, %s6
  %s9 = scalar_select 0, %s8, %s6
  $region1: #{tpu_custom_call.1} parent=0
    #allocation2 [shape = 'u8[65536]{0}', space=vmem, size = 0x10000, scoped, tag = 'output window, operand 0, single buffered']
    #allocation3 [shape = 's32[1]{0}', space=sflag, size = 0x4, scoped, tag = 'scoped memory for tpu_custom_call.1']
    %10 = vsyncpa [#allocation3], 0
    // Predicated region
    $region2: #{tpu_custom_call.1} parent=1 // pred_check
      _
    $region3: #{tpu_custom_call.1} parent=1 // pred_check_branch
      %12 = sbr.rel (0) target = $region5
    $region4: #{tpu_custom_call.1} parent=1 // pred_region
      _
    $region5: #{tpu_custom_call.1} parent=1 // pred_fallthru
      _
    // Predicated region
    $region6: #{tpu_custom_call.1} parent=1 // pred_check
      _
    $region7: #{tpu_custom_call.1} parent=1 // pred_check_branch
      %14 = sbr.rel (0) target = $region9
    $region8: #{tpu_custom_call.1} parent=1 // pred_region
      _
    $region9: #{tpu_custom_call.1} parent=1 // pred_fallthru
      _
    // Predicated region
    $region10: #{tpu_custom_call.1} parent=1 // pred_check
      _
    $region11: #{tpu_custom_call.1} parent=1 // pred_check_branch
      %16 = sbr.rel (0) target = $region13
    $region12: #{tpu_custom_call.1} parent=1 // pred_region
      _
    $region13: #{tpu_custom_call.1} parent=1 // pred_fallthru
      _
    // Predicated region
    $region14: #{tpu_custom_call.1} parent=1 // pred_check
      _
    $region15: #{tpu_custom_call.1} parent=1 // pred_check_branch
      %18 = sbr.rel (0) target = $region17
    $region16: #{tpu_custom_call.1} parent=1 // pred_region
      _
    $region17: #{tpu_custom_call.1} parent=1 // pred_fallthru
      _
    // Predicated region
    $region18: #{tpu_custom_call.1} parent=1 // pred_check
      _
    $region19: #{tpu_custom_call.1} parent=1 // pred_check_branch
      %20 = sbr.rel (0) target = $region21
    $region20: #{tpu_custom_call.1} parent=1 // pred_region
      _
    $region21: #{tpu_custom_call.1} parent=1 // pred_fallthru
      _
    %v21 = vld [vmem:[%s0] sm:$0xff]
    %v22 = vld [vmem:[%s0 + $0x8] sm:$0xff]
    %v23 = vld [vmem:[%s0 + $0x10] sm:$0xff]
    %v24 = vld [vmem:[%s0 + $0x18] sm:$0xff]
    %v25 = vld [vmem:[%s0 + $0x20] sm:$0xff]
    %v26 = vld [vmem:[%s0 + $0x28] sm:$0xff]
    %v27 = vld [vmem:[%s0 + $0x30] sm:$0xff]
    %v28 = vld [vmem:[%s0 + $0x38] sm:$0xff]
    %v29 = vld [vmem:[%s0 + $0x40] sm:$0xff]
    %v30 = vld [vmem:[%s0 + $0x48] sm:$0xff]
    %v31 = vld [vmem:[%s0 + $0x50] sm:$0xff]
    %v32 = vld [vmem:[%s0 + $0x58] sm:$0xff]
    %v33 = vld [vmem:[%s0 + $0x60] sm:$0xff]
    %v34 = vld [vmem:[%s0 + $0x68] sm:$0xff]
    %v35 = vld [vmem:[%s0 + $0x70] sm:$0xff]
    %v36 = vld [vmem:[%s0 + $0x78] sm:$0xff]
    %v37 = vld [vmem:[%s1] sm:$0xff]
    %v38 = vld [vmem:[%s1 + $0x8] sm:$0xff]
    %v39 = vld [vmem:[%s1 + $0x10] sm:$0xff]
    %v40 = vld [vmem:[%s1 + $0x18] sm:$0xff]
    %v41 = vld [vmem:[%s2] sm:$0x1]
    %v43 = vlaneseq
    %v44 = vshrl.u32 %v43, 7
    %v45 = vsub.s32 0, %v44
    %v46 = vrot.slane %v41, %v45
    %vm48 = vcmask 261120
    %v50 = vsel %vm48, %v21, 0
    %v53 = vsel %vm48, %v22, 0
    %v56 = vsel %vm48, %v23, 0
    %v59 = vsel %vm48, %v24, 0
    %v62 = vsel %vm48, %v25, 0
    %v65 = vsel %vm48, %v26, 0
    %v68 = vsel %vm48, %v27, 0
    %v71 = vsel %vm48, %v28, 0
    %v74 = vsel %vm48, %v29, 0
    %v77 = vsel %vm48, %v30, 0
    %v80 = vsel %vm48, %v31, 0
    %v83 = vsel %vm48, %v32, 0
    %v86 = vsel %vm48, %v33, 0
    %v89 = vsel %vm48, %v34, 0
    %v92 = vsel %vm48, %v35, 0
    %v95 = vsel %vm48, %v36, 0
    %97 = vmatprep.subr.mxu0 0.0
    %98 = vmatpush1.msra.mxu0 %v37
    %99 = vmatprep.subr.mxu0 0.0
    %100 = vmatpush1.msra.mxu0 %v38
    %101 = vmatprep.subr.mxu0 0.0
    %102 = vmatpush1.msra.mxu0 %v39
    %103 = vmatprep.subr.mxu0 0.0
    %104 = vmatpush1.msra.mxu0 %v40
    %105 = vmatprep.subr.mxu0 0.0
    %106 = vmatpush1.msra.mxu0 0.0
    %107 = vmatprep.subr.mxu0 0.0
    %108 = vmatpush1.msra.mxu0 0.0
    %109 = vmatprep.subr.mxu0 0.0
    %110 = vmatpush1.msra.mxu0 0.0
    %111 = vmatprep.subr.mxu0 0.0
    %112 = vmatpush1.msra.mxu0 0.0
    %113 = vmatprep.subr.mxu0 0.0
    %114 = vmatpush1.msra.mxu0 0.0
    %115 = vmatprep.subr.mxu0 0.0
    %116 = vmatpush1.msra.mxu0 0.0
    %117 = vmatprep.subr.mxu0 0.0
    %118 = vmatpush1.msra.mxu0 0.0
    %119 = vmatprep.subr.mxu0 0.0
    %120 = vmatpush1.msra.mxu0 0.0
    %121 = vmatprep.subr.mxu0 0.0
    %122 = vmatpush1.msra.mxu0 0.0
    %123 = vmatprep.subr.mxu0 0.0
    %124 = vmatpush1.msra.mxu0 0.0
    %125 = vmatprep.subr.mxu0 0.0
    %126 = vmatpush1.msra.mxu0 0.0
    %127 = vmatprep.subr.mxu0 0.0
    %128 = vmatpush1.msra.mxu0 0.0
    %129 = vmatprep.subr.mxu0 0.0
    %130 = vmatpush1.msra.mxu0 0.0
    %131 = vmatprep.subr.mxu0 0.0
    %132 = vmatpush1.msra.mxu0 0.0
    %133 = vmatprep.subr.mxu0 0.0
    %134 = vmatpush1.msra.mxu0 0.0
    %135 = vmatprep.subr.mxu0 0.0
    %136 = vmatpush1.msra.mxu0 0.0
    %137 = vmatprep.subr.mxu0 0.0
    %138 = vmatpush1.msra.mxu0 0.0
    %139 = vmatprep.subr.mxu0 0.0
    %140 = vmatpush1.msra.mxu0 0.0
    %141 = vmatprep.subr.mxu0 0.0
    %142 = vmatpush1.msra.mxu0 0.0
    %143 = vmatprep.subr.mxu0 0.0
    %144 = vmatpush1.msra.mxu0 0.0
    %145 = vmatprep.subr.mxu0 0.0
    %146 = vmatpush1.msra.mxu0 0.0
    %147 = vmatprep.subr.mxu0 0.0
    %148 = vmatpush1.msra.mxu0 0.0
    %149 = vmatprep.subr.mxu0 0.0
    %150 = vmatpush1.msra.mxu0 0.0
    %151 = vmatprep.subr.mxu0 0.0
    %152 = vmatpush1.msra.mxu0 0.0
    %153 = vmatprep.subr.mxu0 0.0
    %154 = vmatpush1.msra.mxu0 0.0
    %155 = vmatprep.subr.mxu0 0.0
    %156 = vmatpush1.msra.mxu0 0.0
    %157 = vmatprep.subr.mxu0 0.0
    %158 = vmatpush1.msra.mxu0 0.0
    %159 = vmatprep.subr.mxu0 0.0
    %160 = vmatpush1.msra.mxu0 0.0
    %161 = vmatprep.mubr.f32.mxu0 0.0
    %162 = vmatmul.mubr.f32.gmra.mrb[0].mxu0 %v50
    %v163 = vpop.f32.mrb[0].mxu0
    %v164 = vadd.f32 %v46, %v163
    %v165 = vpop.f32.mrb[0].mxu0
    %166 = vmatprep.mubr.f32.mxu0 0.0
    %167 = vmatmul.mubr.f32.gmra.mrb[0].mxu0 %v53
    %v168 = vpop.f32.mrb[0].mxu0
    %v169 = vadd.f32 %v46, %v168
    %v170 = vpop.f32.mrb[0].mxu0
    %171 = vmatprep.mubr.f32.mxu0 0.0
    %172 = vmatmul.mubr.f32.gmra.mrb[0].mxu0 %v56
    %v173 = vpop.f32.mrb[0].mxu0
    %v174 = vadd.f32 %v46, %v173
    %v175 = vpop.f32.mrb[0].mxu0
    %176 = vmatprep.mubr.f32.mxu0 0.0
    %177 = vmatmul.mubr.f32.gmra.mrb[0].mxu0 %v59
    %v178 = vpop.f32.mrb[0].mxu0
    %v179 = vadd.f32 %v46, %v178
    %v180 = vpop.f32.mrb[0].mxu0
    %181 = vmatprep.mubr.f32.mxu0 0.0
    %182 = vmatmul.mubr.f32.gmra.mrb[0].mxu0 %v62
    %v183 = vpop.f32.mrb[0].mxu0
    %v184 = vadd.f32 %v46, %v183
    %v185 = vpop.f32.mrb[0].mxu0
    %186 = vmatprep.mubr.f32.mxu0 0.0
    %187 = vmatmul.mubr.f32.gmra.mrb[0].mxu0 %v65
    %v188 = vpop.f32.mrb[0].mxu0
    %v189 = vadd.f32 %v46, %v188
    %v190 = vpop.f32.mrb[0].mxu0
    %191 = vmatprep.mubr.f32.mxu0 0.0
    %192 = vmatmul.mubr.f32.gmra.mrb[0].mxu0 %v68
    %v193 = vpop.f32.mrb[0].mxu0
    %v194 = vadd.f32 %v46, %v193
    %v195 = vpop.f32.mrb[0].mxu0
    %196 = vmatprep.mubr.f32.mxu0 0.0
    %197 = vmatmul.mubr.f32.gmra.mrb[0].mxu0 %v71
    %v198 = vpop.f32.mrb[0].mxu0
    %v199 = vadd.f32 %v46, %v198
    %v200 = vpop.f32.mrb[0].mxu0
    %201 = vmatprep.mubr.f32.mxu0 0.0
    %202 = vmatmul.mubr.f32.gmra.mrb[0].mxu0 %v74
    %v203 = vpop.f32.mrb[0].mxu0
    %v204 = vadd.f32 %v46, %v203
    %v205 = vpop.f32.mrb[0].mxu0
    %206 = vmatprep.mubr.f32.mxu0 0.0
    %207 = vmatmul.mubr.f32.gmra.mrb[0].mxu0 %v77
    %v208 = vpop.f32.mrb[0].mxu0
    %v209 = vadd.f32 %v46, %v208
    %v210 = vpop.f32.mrb[0].mxu0
    %211 = vmatprep.mubr.f32.mxu0 0.0
    %212 = vmatmul.mubr.f32.gmra.mrb[0].mxu0 %v80
    %v213 = vpop.f32.mrb[0].mxu0
    %v214 = vadd.f32 %v46, %v213
    %v215 = vpop.f32.mrb[0].mxu0
    %216 = vmatprep.mubr.f32.mxu0 0.0
    %217 = vmatmul.mubr.f32.gmra.mrb[0].mxu0 %v83
    %v218 = vpop.f32.mrb[0].mxu0
    %v219 = vadd.f32 %v46, %v218
    %v220 = vpop.f32.mrb[0].mxu0
    %221 = vmatprep.mubr.f32.mxu0 0.0
    %222 = vmatmul.mubr.f32.gmra.mrb[0].mxu0 %v86
    %v223 = vpop.f32.mrb[0].mxu0
    %v224 = vadd.f32 %v46, %v223
    %v225 = vpop.f32.mrb[0].mxu0
    %226 = vmatprep.mubr.f32.mxu0 0.0
    %227 = vmatmul.mubr.f32.gmra.mrb[0].mxu0 %v89
    %v228 = vpop.f32.mrb[0].mxu0
    %v229 = vadd.f32 %v46, %v228
    %v230 = vpop.f32.mrb[0].mxu0
    %231 = vmatprep.mubr.f32.mxu0 0.0
    %232 = vmatmul.mubr.f32.gmra.mrb[0].mxu0 %v92
    %v233 = vpop.f32.mrb[0].mxu0
    %v234 = vadd.f32 %v46, %v233
    %v235 = vpop.f32.mrb[0].mxu0
    %236 = vmatprep.mubr.f32.mxu0 0.0
    %237 = vmatmul.mubr.f32.gmra.mrb[0].mxu0 %v95
    %v238 = vpop.f32.mrb[0].mxu0
    %v239 = vadd.f32 %v46, %v238
    %v240 = vpop.f32.mrb[0].mxu0
    %241 = vdwg.mxu0
    %v242 = vmax.f32 %v164, 0.0
    %v243 = vmax.f32 %v169, 0.0
    %v244 = vmax.f32 %v174, 0.0
    %v245 = vmax.f32 %v179, 0.0
    %v246 = vmax.f32 %v184, 0.0
    %v247 = vmax.f32 %v189, 0.0
    %v248 = vmax.f32 %v194, 0.0
    %v249 = vmax.f32 %v199, 0.0
    %v250 = vmax.f32 %v204, 0.0
    %v251 = vmax.f32 %v209, 0.0
    %v252 = vmax.f32 %v214, 0.0
    %v253 = vmax.f32 %v219, 0.0
    %v254 = vmax.f32 %v224, 0.0
    %v255 = vmax.f32 %v229, 0.0
    %v256 = vmax.f32 %v234, 0.0
    %v257 = vmax.f32 %v239, 0.0
    %v258 = vld [vmem:[%s3] sm:$0xff]
    %v259 = vld [vmem:[%s3 + $0x8] sm:$0xff]
    %v260 = vld [vmem:[%s3 + $0x10] sm:$0xff]
    %v261 = vld [vmem:[%s3 + $0x18] sm:$0xff]
    %v262 = vld [vmem:[%s4] sm:$0x1]
    %v264 = vlaneseq
    %v265 = vshrl.u32 %v264, 7
    %v266 = vsub.s32 0, %v265
    %v267 = vrot.slane %v262, %v266
    %v270 = vsel %vm48, %v242, 0
    %v273 = vsel %vm48, %v243, 0
    %v276 = vsel %vm48, %v244, 0
    %v279 = vsel %vm48, %v245, 0
    %v282 = vsel %vm48, %v246, 0
    %v285 = vsel %vm48, %v247, 0
    %v288 = vsel %vm48, %v248, 0
    %v291 = vsel %vm48, %v249, 0
    %v294 = vsel %vm48, %v250, 0
    %v297 = vsel %vm48, %v251, 0
    %v300 = vsel %vm48, %v252, 0
    %v303 = vsel %vm48, %v253, 0
    %v306 = vsel %vm48, %v254, 0
    %v309 = vsel %vm48, %v255, 0
    %v312 = vsel %vm48, %v256, 0
    %v315 = vsel %vm48, %v257, 0
    %317 = vmatprep.subr.mxu0 0.0
    %318 = vmatpush1.msra.mxu0 %v258
    %319 = vmatprep.subr.mxu0 0.0
    %320 = vmatpush1.msra.mxu0 %v259
    %321 = vmatprep.subr.mxu0 0.0
    %322 = vmatpush1.msra.mxu0 %v260
    %323 = vmatprep.subr.mxu0 0.0
    %324 = vmatpush1.msra.mxu0 %v261
    %325 = vmatprep.subr.mxu0 0.0
    %326 = vmatpush1.msra.mxu0 0.0
    %327 = vmatprep.subr.mxu0 0.0
    %328 = vmatpush1.msra.mxu0 0.0
    %329 = vmatprep.subr.mxu0 0.0
    %330 = vmatpush1.msra.mxu0 0.0
    %331 = vmatprep.subr.mxu0 0.0
    %332 = vmatpush1.msra.mxu0 0.0
    %333 = vmatprep.subr.mxu0 0.0
    %334 = vmatpush1.msra.mxu0 0.0
    %335 = vmatprep.subr.mxu0 0.0
    %336 = vmatpush1.msra.mxu0 0.0
    %337 = vmatprep.subr.mxu0 0.0
    %338 = vmatpush1.msra.mxu0 0.0
    %339 = vmatprep.subr.mxu0 0.0
    %340 = vmatpush1.msra.mxu0 0.0
    %341 = vmatprep.subr.mxu0 0.0
    %342 = vmatpush1.msra.mxu0 0.0
    %343 = vmatprep.subr.mxu0 0.0
    %344 = vmatpush1.msra.mxu0 0.0
    %345 = vmatprep.subr.mxu0 0.0
    %346 = vmatpush1.msra.mxu0 0.0
    %347 = vmatprep.subr.mxu0 0.0
    %348 = vmatpush1.msra.mxu0 0.0
    %349 = vmatprep.subr.mxu0 0.0
    %350 = vmatpush1.msra.mxu0 0.0
    %351 = vmatprep.subr.mxu0 0.0
    %352 = vmatpush1.msra.mxu0 0.0
    %353 = vmatprep.subr.mxu0 0.0
    %354 = vmatpush1.msra.mxu0 0.0
    %355 = vmatprep.subr.mxu0 0.0
    %356 = vmatpush1.msra.mxu0 0.0
    %357 = vmatprep.subr.mxu0 0.0
    %358 = vmatpush1.msra.mxu0 0.0
    %359 = vmatprep.subr.mxu0 0.0
    %360 = vmatpush1.msra.mxu0 0.0
    %361 = vmatprep.subr.mxu0 0.0
    %362 = vmatpush1.msra.mxu0 0.0
    %363 = vmatprep.subr.mxu0 0.0
    %364 = vmatpush1.msra.mxu0 0.0
    %365 = vmatprep.subr.mxu0 0.0
    %366 = vmatpush1.msra.mxu0 0.0
    %367 = vmatprep.subr.mxu0 0.0
    %368 = vmatpush1.msra.mxu0 0.0
    %369 = vmatprep.subr.mxu0 0.0
    %370 = vmatpush1.msra.mxu0 0.0
    %371 = vmatprep.subr.mxu0 0.0
    %372 = vmatpush1.msra.mxu0 0.0
    %373 = vmatprep.subr.mxu0 0.0
    %374 = vmatpush1.msra.mxu0 0.0
    %375 = vmatprep.subr.mxu0 0.0
    %376 = vmatpush1.msra.mxu0 0.0
    %377 = vmatprep.subr.mxu0 0.0
    %378 = vmatpush1.msra.mxu0 0.0
    %379 = vmatprep.subr.mxu0 0.0
    %380 = vmatpush1.msra.mxu0 0.0
    %381 = vmatprep.mubr.f32.mxu0 0.0
    %382 = vmatmul.mubr.f32.gmra.mrb[0].mxu0 %v270
    %v383 = vpop.f32.mrb[0].mxu0
    %v384 = vadd.f32 %v267, %v383
    %v385 = vpop.f32.mrb[0].mxu0
    %386 = vmatprep.mubr.f32.mxu0 0.0
    %387 = vmatmul.mubr.f32.gmra.mrb[0].mxu0 %v273
    %v388 = vpop.f32.mrb[0].mxu0
    %v389 = vadd.f32 %v267, %v388
    %v390 = vpop.f32.mrb[0].mxu0
    %391 = vmatprep.mubr.f32.mxu0 0.0
    %392 = vmatmul.mubr.f32.gmra.mrb[0].mxu0 %v276
    %v393 = vpop.f32.mrb[0].mxu0
    %v394 = vadd.f32 %v267, %v393
    %v395 = vpop.f32.mrb[0].mxu0
    %396 = vmatprep.mubr.f32.mxu0 0.0
    %397 = vmatmul.mubr.f32.gmra.mrb[0].mxu0 %v279
    %v398 = vpop.f32.mrb[0].mxu0
    %v399 = vadd.f32 %v267, %v398
    %v400 = vpop.f32.mrb[0].mxu0
    %401 = vmatprep.mubr.f32.mxu0 0.0
    %402 = vmatmul.mubr.f32.gmra.mrb[0].mxu0 %v282
    %v403 = vpop.f32.mrb[0].mxu0
    %v404 = vadd.f32 %v267, %v403
    %v405 = vpop.f32.mrb[0].mxu0
    %406 = vmatprep.mubr.f32.mxu0 0.0
    %407 = vmatmul.mubr.f32.gmra.mrb[0].mxu0 %v285
    %v408 = vpop.f32.mrb[0].mxu0
    %v409 = vadd.f32 %v267, %v408
    %v410 = vpop.f32.mrb[0].mxu0
    %411 = vmatprep.mubr.f32.mxu0 0.0
    %412 = vmatmul.mubr.f32.gmra.mrb[0].mxu0 %v288
    %v413 = vpop.f32.mrb[0].mxu0
    %v414 = vadd.f32 %v267, %v413
    %v415 = vpop.f32.mrb[0].mxu0
    %416 = vmatprep.mubr.f32.mxu0 0.0
    %417 = vmatmul.mubr.f32.gmra.mrb[0].mxu0 %v291
    %v418 = vpop.f32.mrb[0].mxu0
    %v419 = vadd.f32 %v267, %v418
    %v420 = vpop.f32.mrb[0].mxu0
    %421 = vmatprep.mubr.f32.mxu0 0.0
    %422 = vmatmul.mubr.f32.gmra.mrb[0].mxu0 %v294
    %v423 = vpop.f32.mrb[0].mxu0
    %v424 = vadd.f32 %v267, %v423
    %v425 = vpop.f32.mrb[0].mxu0
    %426 = vmatprep.mubr.f32.mxu0 0.0
    %427 = vmatmul.mubr.f32.gmra.mrb[0].mxu0 %v297
    %v428 = vpop.f32.mrb[0].mxu0
    %v429 = vadd.f32 %v267, %v428
    %v430 = vpop.f32.mrb[0].mxu0
    %431 = vmatprep.mubr.f32.mxu0 0.0
    %432 = vmatmul.mubr.f32.gmra.mrb[0].mxu0 %v300
    %v433 = vpop.f32.mrb[0].mxu0
    %v434 = vadd.f32 %v267, %v433
    %v435 = vpop.f32.mrb[0].mxu0
    %436 = vmatprep.mubr.f32.mxu0 0.0
    %437 = vmatmul.mubr.f32.gmra.mrb[0].mxu0 %v303
    %v438 = vpop.f32.mrb[0].mxu0
    %v439 = vadd.f32 %v267, %v438
    %v440 = vpop.f32.mrb[0].mxu0
    %441 = vmatprep.mubr.f32.mxu0 0.0
    %442 = vmatmul.mubr.f32.gmra.mrb[0].mxu0 %v306
    %v443 = vpop.f32.mrb[0].mxu0
    %v444 = vadd.f32 %v267, %v443
    %v445 = vpop.f32.mrb[0].mxu0
    %446 = vmatprep.mubr.f32.mxu0 0.0
    %447 = vmatmul.mubr.f32.gmra.mrb[0].mxu0 %v309
    %v448 = vpop.f32.mrb[0].mxu0
    %v449 = vadd.f32 %v267, %v448
    %v450 = vpop.f32.mrb[0].mxu0
    %451 = vmatprep.mubr.f32.mxu0 0.0
    %452 = vmatmul.mubr.f32.gmra.mrb[0].mxu0 %v312
    %v453 = vpop.f32.mrb[0].mxu0
    %v454 = vadd.f32 %v267, %v453
    %v455 = vpop.f32.mrb[0].mxu0
    %456 = vmatprep.mubr.f32.mxu0 0.0
    %457 = vmatmul.mubr.f32.gmra.mrb[0].mxu0 %v315
    %v458 = vpop.f32.mrb[0].mxu0
    %v459 = vadd.f32 %v267, %v458
    %v460 = vpop.f32.mrb[0].mxu0
    %461 = vdwg.mxu0
    %462 = vst [vmem:[#allocation2] sm:$0xff] %v384
    %463 = vst [vmem:[#allocation2 + $0x8] sm:$0xff] %v389
    %464 = vst [vmem:[#allocation2 + $0x10] sm:$0xff] %v394
    %465 = vst [vmem:[#allocation2 + $0x18] sm:$0xff] %v399
    %466 = vst [vmem:[#allocation2 + $0x20] sm:$0xff] %v404
    %467 = vst [vmem:[#allocation2 + $0x28] sm:$0xff] %v409
    %468 = vst [vmem:[#allocation2 + $0x30] sm:$0xff] %v414
    %469 = vst [vmem:[#allocation2 + $0x38] sm:$0xff] %v419
    %470 = vst [vmem:[#allocation2 + $0x40] sm:$0xff] %v424
    %471 = vst [vmem:[#allocation2 + $0x48] sm:$0xff] %v429
    %472 = vst [vmem:[#allocation2 + $0x50] sm:$0xff] %v434
    %473 = vst [vmem:[#allocation2 + $0x58] sm:$0xff] %v439
    %474 = vst [vmem:[#allocation2 + $0x60] sm:$0xff] %v444
    %475 = vst [vmem:[#allocation2 + $0x68] sm:$0xff] %v449
    %476 = vst [vmem:[#allocation2 + $0x70] sm:$0xff] %v454
    %477 = vst [vmem:[#allocation2 + $0x78] sm:$0xff] %v459
    // Predicated region
    $region22: #{tpu_custom_call.1} parent=1 // pred_check
      _
    $region23: #{tpu_custom_call.1} parent=1 // pred_check_branch
      %479 = sbr.rel (0) target = $region25
    $region24: #{tpu_custom_call.1} parent=1 // pred_region
      %s481 = ssub.s32 2048, 2048
      %482 = vsyncadd [#allocation3], %s481
      %s483 = sshll.u32 [#allocation2], 4
      %s484 = int_to_ptr.vmem [resolvable:$true] %s483
      %489 = dma.vmem_to_hbm [thread:$0]  %s484, 2048, %s5, [#allocation3], 128, 128, 8
    $region25: #{tpu_custom_call.1} parent=1 // pred_fallthru
      _
    // Predicated region
    $region26: #{tpu_custom_call.1} parent=1 // pred_check
      _
    $region27: #{tpu_custom_call.1} parent=1 // pred_check_branch
      %491 = sbr.rel (0) target = $region29
    $region28: #{tpu_custom_call.1} parent=1 // pred_region
      %492 = dma.done [#allocation3], 2048
    $region29: #{tpu_custom_call.1} parent=1 // pred_fallthru
      _
    %493 = vsyncpa [#allocation3], 1

</llo_original>
